<compile_context>
chip_gen: v5e
topology: v5e:2x2
jax: 0.10.0
libtpu: 0.0.40
codegen_flags: <defaults>
</compile_context>

<pallas_src>
import jax
import jax.numpy as jnp
from jax.experimental import pallas as pl
from jax.experimental.pallas import tpu as pltpu  # noqa: F401  (TPU backend)

EPS = 1e-5


def _bn_relu_kernel(x_ref, gamma_ref, beta_ref, o_ref):
    # x_ref: (C, M) with M = N*H*W ; gamma_ref / beta_ref: (C, 1)
    _, m = x_ref.shape
    inv_m = 1.0 / float(m)

    # --- single-pass per-channel batch statistics (biased variance) ---
    xf = x_ref[...].astype(jnp.float32)
    mean = jnp.sum(xf, axis=-1, keepdims=True) * inv_m            # (C, 1)
    mean_sq = jnp.sum(xf * xf, axis=-1, keepdims=True) * inv_m    # (C, 1)
    var = jnp.maximum(mean_sq - mean * mean, 0.0)                 # guard cancellation

    # --- fold BN + affine into one per-channel scale / shift ---
    a = gamma_ref[...] * jax.lax.rsqrt(var + EPS)                 # (C, 1)
    b = beta_ref[...] - mean * a                                  # (C, 1)

    # --- normalize + affine + ReLU in one elementwise pass ---
    y = x_ref[...].astype(jnp.float32) * a + b
    o_ref[...] = jnp.maximum(y, 0.0).astype(o_ref.dtype)


def batchnorm_relu(x_nchw, gamma, beta):
    """Training-mode BatchNorm2d(eps=1e-5, affine=True) + ReLU. x: (N,C,H,W)."""
    n, c, h, w = x_nchw.shape
    m = n * h * w

    if n == 1:
        # pure reshape -- no data movement / extra HBM pass
        x2d = x_nchw.reshape(c, m)
    else:
        # TODO(synk): for N>1, fold the NCHW->(C, N*H*W) rearrangement into the
        # kernel via a grid over N instead of this wrapper transpose.
        x2d = jnp.transpose(x_nchw, (1, 0, 2, 3)).reshape(c, m)

    g2d = gamma.reshape(c, 1).astype(jnp.float32)
    b2d = beta.reshape(c, 1).astype(jnp.float32)

    out2d = pl.pallas_call(
        _bn_relu_kernel,
        out_shape=jax.ShapeDtypeStruct((c, m), x_nchw.dtype),
        in_specs=[
            pl.BlockSpec((c, m), lambda: (0, 0)),
            pl.BlockSpec((c, 1), lambda: (0, 0)),
            pl.BlockSpec((c, 1), lambda: (0, 0)),
        ],
        out_specs=pl.BlockSpec((c, m), lambda: (0, 0)),
        input_output_aliases={0: 0},  # in-place, like ReLU(inplace=True)
    )(x2d, g2d, b2d)

    if n == 1:
        return out2d.reshape(n, c, h, w)
    return jnp.transpose(out2d.reshape(c, n, h, w), (1, 0, 2, 3))


def _reference(x_nchw, gamma, beta):
    # pure-JAX reference of training-mode BN (batch stats, biased var) + ReLU
    mean = jnp.mean(x_nchw, axis=(0, 2, 3), keepdims=True)
    var = jnp.mean((x_nchw - mean) ** 2, axis=(0, 2, 3), keepdims=True)
    y = (x_nchw - mean) / jnp.sqrt(var + EPS)
    y = y * gamma.reshape(1, -1, 1, 1) + beta.reshape(1, -1, 1, 1)
    return jnp.maximum(y, 0.0)


if __name__ == "__main__":
    key = jax.random.PRNGKey(0)
    kx, kg, kb = jax.random.split(key, 3)

    # shapes implied by the module: (1, 256, 14, 14), BN over 256 channels
    x = jax.random.normal(kx, (1, 256, 14, 14), dtype=jnp.float32)
    gamma = 1.0 + 0.1 * jax.random.normal(kg, (256,), dtype=jnp.float32)
    beta = 0.1 * jax.random.normal(kb, (256,), dtype=jnp.float32)

    out = jax.block_until_ready(batchnorm_relu(x, gamma, beta))

    ref = _reference(x, gamma, beta)
    assert out.shape == (1, 256, 14, 14)
    assert jnp.allclose(out, ref, atol=1e-4, rtol=1e-4), "mismatch vs reference"

    print("KERNEL_OK")
</pallas_src>

<mosaic_0001>
module attributes {stable_mosaic.version = 11 : i64} {
  func.func @_bn_relu_kernel(%arg0: memref<256x196xf32, #tpu.memory_space<vmem>>, %arg1: memref<256x1xf32, #tpu.memory_space<vmem>>, %arg2: memref<256x1xf32, #tpu.memory_space<vmem>>, %arg3: memref<256x196xf32, #tpu.memory_space<vmem>>) attributes {dimension_semantics = [], scalar_prefetch = 0 : i64, scratch_operands = 0 : i64, tpu.core_type = #tpu.core_type<tc>} {
    %c0 = arith.constant 0 : index
    %c0_0 = arith.constant 0 : index
    %0 = vector.load %arg0[%c0, %c0_0] : memref<256x196xf32, #tpu.memory_space<vmem>>, vector<256x196xf32>
    %cst = arith.constant dense<0.000000e+00> : vector<256xf32>
    %1 = vector.multi_reduction <add>, %0, %cst [1] : vector<256x196xf32> to vector<256xf32>
    %2 = vector.shape_cast %1 : vector<256xf32> to vector<256x1xf32>
    %cst_1 = arith.constant 0.00510204071 : f32
    %3 = vector.broadcast %cst_1 : f32 to vector<256x1xf32>
    %4 = arith.mulf %2, %3 : vector<256x1xf32>
    %5 = arith.mulf %0, %0 : vector<256x196xf32>
    %cst_2 = arith.constant dense<0.000000e+00> : vector<256xf32>
    %6 = vector.multi_reduction <add>, %5, %cst_2 [1] : vector<256x196xf32> to vector<256xf32>
    %7 = vector.shape_cast %6 : vector<256xf32> to vector<256x1xf32>
    %cst_3 = arith.constant 0.00510204071 : f32
    %8 = vector.broadcast %cst_3 : f32 to vector<256x1xf32>
    %9 = arith.mulf %7, %8 : vector<256x1xf32>
    %10 = arith.mulf %4, %4 : vector<256x1xf32>
    %11 = arith.subf %9, %10 : vector<256x1xf32>
    %cst_4 = arith.constant 0.000000e+00 : f32
    %12 = vector.broadcast %cst_4 : f32 to vector<256x1xf32>
    %13 = arith.maximumf %11, %12 : vector<256x1xf32>
    %c0_5 = arith.constant 0 : index
    %c0_6 = arith.constant 0 : index
    %14 = vector.load %arg1[%c0_5, %c0_6] : memref<256x1xf32, #tpu.memory_space<vmem>>, vector<256x1xf32>
    %cst_7 = arith.constant 9.99999974E-6 : f32
    %15 = vector.broadcast %cst_7 : f32 to vector<256x1xf32>
    %16 = arith.addf %13, %15 : vector<256x1xf32>
    %17 = math.rsqrt %16 : vector<256x1xf32>
    %18 = arith.mulf %14, %17 : vector<256x1xf32>
    %c0_8 = arith.constant 0 : index
    %c0_9 = arith.constant 0 : index
    %19 = vector.load %arg2[%c0_8, %c0_9] : memref<256x1xf32, #tpu.memory_space<vmem>>, vector<256x1xf32>
    %20 = arith.mulf %4, %18 : vector<256x1xf32>
    %21 = arith.subf %19, %20 : vector<256x1xf32>
    %c0_10 = arith.constant 0 : index
    %c0_11 = arith.constant 0 : index
    %22 = vector.load %arg0[%c0_10, %c0_11] : memref<256x196xf32, #tpu.memory_space<vmem>>, vector<256x196xf32>
    %23 = vector.broadcast %18 : vector<256x1xf32> to vector<256x196xf32>
    %24 = arith.mulf %22, %23 : vector<256x196xf32>
    %25 = vector.broadcast %21 : vector<256x1xf32> to vector<256x196xf32>
    %26 = arith.addf %24, %25 : vector<256x196xf32>
    %cst_12 = arith.constant 0.000000e+00 : f32
    %27 = vector.broadcast %cst_12 : f32 to vector<256x196xf32>
    %28 = arith.maximumf %26, %27 : vector<256x196xf32>
    %c0_13 = arith.constant 0 : index
    %c0_14 = arith.constant 0 : index
    %29 = vector.load %arg3[%c0_13, %c0_14] : memref<256x196xf32, #tpu.memory_space<vmem>>, vector<256x196xf32>
    tpu.vector_store %arg3[%c0_13, %c0_14], %28 {strides = array<i32>} : memref<256x196xf32, #tpu.memory_space<vmem>>, vector<256x196xf32>,
    return
  }
}

</mosaic_0001>

<llo_original>
// kernel: tpu_custom_call.1
$region0: #{tpu_custom_call.1}
  #allocation0 [shape = 'u32[]', space=smem, size = 0x4, offset = 0x4, fixed_abs, tag = 'smem constant byte address 0x4 - core index']
  #allocation1 [shape = 'u32[72,128]{1,0:T(1,128)}', space=vmem, size = 0x9000, scoped, tag = 'internal scratch']
  %s0 = inlined_call_operand.vmem [shape: f32[256,196], index: 0, kind: input, shape index: {}, may-alias: {0,3}]
  %s1 = inlined_call_operand.vmem [shape: f32[256,1], index: 1, kind: input, shape index: {}]
  %s2 = inlined_call_operand.vmem [shape: f32[256,1], index: 2, kind: input, shape index: {}]
  %s3 = inlined_call_operand.vmem [shape: f32[256,196], index: 3, kind: output, shape index: {}, may-alias: {0,3}]
  %s4 = sld [smem:[#allocation0]]
  $region22: #{tpu_custom_call.1} parent=0
    _
  %s6 = ssub.s32 1, %s4
  %s7 = scalar_select 0, %s6, %s4
  // Predicated region
  $region2: #{tpu_custom_call.1} parent=0 // pred_check
    _
  $region3: #{tpu_custom_call.1} parent=0 // pred_check_branch
    %9 = sbr.rel (0) target = $region5
  $region4: #{tpu_custom_call.1} parent=0 // pred_region
    _
  $region5: #{tpu_custom_call.1} parent=0 // pred_fallthru
    _
  // Predicated region
  $region6: #{tpu_custom_call.1} parent=0 // pred_check
    _
  $region7: #{tpu_custom_call.1} parent=0 // pred_check_branch
    %11 = sbr.rel (0) target = $region9
  $region8: #{tpu_custom_call.1} parent=0 // pred_region
    _
  $region9: #{tpu_custom_call.1} parent=0 // pred_fallthru
    _
  // Predicated region
  $region10: #{tpu_custom_call.1} parent=0 // pred_check
    _
  $region11: #{tpu_custom_call.1} parent=0 // pred_check_branch
    %13 = sbr.rel (0) target = $region13
  $region12: #{tpu_custom_call.1} parent=0 // pred_region
    _
  $region13: #{tpu_custom_call.1} parent=0 // pred_fallthru
    _
  %v14 = vld [vmem:[%s0] sm:$0xff]
  %v15 = vld [vmem:[%s0 + $0x8] sm:$0xff]
  %v16 = vld [vmem:[%s0 + $0x10] sm:$0xff]
  %v17 = vld [vmem:[%s0 + $0x18] sm:$0xff]
  %v18 = vld [vmem:[%s0 + $0x20] sm:$0xff]
  %v19 = vld [vmem:[%s0 + $0x28] sm:$0xff]
  %v20 = vld [vmem:[%s0 + $0x30] sm:$0xff]
  %v21 = vld [vmem:[%s0 + $0x38] sm:$0xff]
  %v22 = vld [vmem:[%s0 + $0x40] sm:$0xff]
  %v23 = vld [vmem:[%s0 + $0x48] sm:$0xff]
  %v24 = vld [vmem:[%s0 + $0x50] sm:$0xff]
  %v25 = vld [vmem:[%s0 + $0x58] sm:$0xff]
  %v26 = vld [vmem:[%s0 + $0x60] sm:$0xff]
  %v27 = vld [vmem:[%s0 + $0x68] sm:$0xff]
  %v28 = vld [vmem:[%s0 + $0x70] sm:$0xff]
  %v29 = vld [vmem:[%s0 + $0x78] sm:$0xff]
  %v30 = vld [vmem:[%s0 + $0x80] sm:$0xff]
  %v31 = vld [vmem:[%s0 + $0x88] sm:$0xff]
  %v32 = vld [vmem:[%s0 + $0x90] sm:$0xff]
  %v33 = vld [vmem:[%s0 + $0x98] sm:$0xff]
  %v34 = vld [vmem:[%s0 + $0xa0] sm:$0xff]
  %v35 = vld [vmem:[%s0 + $0xa8] sm:$0xff]
  %v36 = vld [vmem:[%s0 + $0xb0] sm:$0xff]
  %v37 = vld [vmem:[%s0 + $0xb8] sm:$0xff]
  %v38 = vld [vmem:[%s0 + $0xc0] sm:$0xff]
  %v39 = vld [vmem:[%s0 + $0xc8] sm:$0xff]
  %v40 = vld [vmem:[%s0 + $0xd0] sm:$0xff]
  %v41 = vld [vmem:[%s0 + $0xd8] sm:$0xff]
  %v42 = vld [vmem:[%s0 + $0xe0] sm:$0xff]
  %v43 = vld [vmem:[%s0 + $0xe8] sm:$0xff]
  %v44 = vld [vmem:[%s0 + $0xf0] sm:$0xff]
  %v45 = vld [vmem:[%s0 + $0xf8] sm:$0xff]
  %v46 = vld [vmem:[%s0 + $0x100] sm:$0xff]
  %v47 = vld [vmem:[%s0 + $0x108] sm:$0xff]
  %v48 = vld [vmem:[%s0 + $0x110] sm:$0xff]
  %v49 = vld [vmem:[%s0 + $0x118] sm:$0xff]
  %v50 = vld [vmem:[%s0 + $0x120] sm:$0xff]
  %v51 = vld [vmem:[%s0 + $0x128] sm:$0xff]
  %v52 = vld [vmem:[%s0 + $0x130] sm:$0xff]
  %v53 = vld [vmem:[%s0 + $0x138] sm:$0xff]
  %v54 = vld [vmem:[%s0 + $0x140] sm:$0xff]
  %v55 = vld [vmem:[%s0 + $0x148] sm:$0xff]
  %v56 = vld [vmem:[%s0 + $0x150] sm:$0xff]
  %v57 = vld [vmem:[%s0 + $0x158] sm:$0xff]
  %v58 = vld [vmem:[%s0 + $0x160] sm:$0xff]
  %v59 = vld [vmem:[%s0 + $0x168] sm:$0xff]
  %v60 = vld [vmem:[%s0 + $0x170] sm:$0xff]
  %v61 = vld [vmem:[%s0 + $0x178] sm:$0xff]
  %v62 = vld [vmem:[%s0 + $0x180] sm:$0xff]
  %v63 = vld [vmem:[%s0 + $0x188] sm:$0xff]
  %v64 = vld [vmem:[%s0 + $0x190] sm:$0xff]
  %v65 = vld [vmem:[%s0 + $0x198] sm:$0xff]
  %v66 = vld [vmem:[%s0 + $0x1a0] sm:$0xff]
  %v67 = vld [vmem:[%s0 + $0x1a8] sm:$0xff]
  %v68 = vld [vmem:[%s0 + $0x1b0] sm:$0xff]
  %v69 = vld [vmem:[%s0 + $0x1b8] sm:$0xff]
  %v70 = vld [vmem:[%s0 + $0x1c0] sm:$0xff]
  %v71 = vld [vmem:[%s0 + $0x1c8] sm:$0xff]
  %v72 = vld [vmem:[%s0 + $0x1d0] sm:$0xff]
  %v73 = vld [vmem:[%s0 + $0x1d8] sm:$0xff]
  %v74 = vld [vmem:[%s0 + $0x1e0] sm:$0xff]
  %v75 = vld [vmem:[%s0 + $0x1e8] sm:$0xff]
  %v76 = vld [vmem:[%s0 + $0x1f0] sm:$0xff]
  %v77 = vld [vmem:[%s0 + $0x1f8] sm:$0xff]
  %vm78 = vcmask 556032
  %v79 = vsel %vm78, %v15, 0.0
  %v80 = vadd.f32 %v14, %v79
  %81 = vadd.xlane.f32.xlu0 %v80
  %v82 = vpop.xlane.xlu0 %81
  %v83 = vsel %vm78, %v17, 0.0
  %v84 = vadd.f32 %v16, %v83
  %85 = vadd.xlane.f32.xlu0 %v84
  %v86 = vpop.xlane.xlu0 %85
  %v87 = vsel %vm78, %v19, 0.0
  %v88 = vadd.f32 %v18, %v87
  %89 = vadd.xlane.f32.xlu0 %v88
  %v90 = vpop.xlane.xlu0 %89
  %v91 = vsel %vm78, %v21, 0.0
  %v92 = vadd.f32 %v20, %v91
  %93 = vadd.xlane.f32.xlu0 %v92
  %v94 = vpop.xlane.xlu0 %93
  %v95 = vsel %vm78, %v23, 0.0
  %v96 = vadd.f32 %v22, %v95
  %97 = vadd.xlane.f32.xlu0 %v96
  %v98 = vpop.xlane.xlu0 %97
  %v99 = vsel %vm78, %v25, 0.0
  %v100 = vadd.f32 %v24, %v99
  %101 = vadd.xlane.f32.xlu0 %v100
  %v102 = vpop.xlane.xlu0 %101
  %v103 = vsel %vm78, %v27, 0.0
  %v104 = vadd.f32 %v26, %v103
  %105 = vadd.xlane.f32.xlu0 %v104
  %v106 = vpop.xlane.xlu0 %105
  %v107 = vsel %vm78, %v29, 0.0
  %v108 = vadd.f32 %v28, %v107
  %109 = vadd.xlane.f32.xlu0 %v108
  %v110 = vpop.xlane.xlu0 %109
  %v111 = vsel %vm78, %v31, 0.0
  %v112 = vadd.f32 %v30, %v111
  %113 = vadd.xlane.f32.xlu0 %v112
  %v114 = vpop.xlane.xlu0 %113
  %v115 = vsel %vm78, %v33, 0.0
  %v116 = vadd.f32 %v32, %v115
  %117 = vadd.xlane.f32.xlu0 %v116
  %v118 = vpop.xlane.xlu0 %117
  %v119 = vsel %vm78, %v35, 0.0
  %v120 = vadd.f32 %v34, %v119
  %121 = vadd.xlane.f32.xlu0 %v120
  %v122 = vpop.xlane.xlu0 %121
  %v123 = vsel %vm78, %v37, 0.0
  %v124 = vadd.f32 %v36, %v123
  %125 = vadd.xlane.f32.xlu0 %v124
  %v126 = vpop.xlane.xlu0 %125
  %v127 = vsel %vm78, %v39, 0.0
  %v128 = vadd.f32 %v38, %v127
  %129 = vadd.xlane.f32.xlu0 %v128
  %v130 = vpop.xlane.xlu0 %129
  %v131 = vsel %vm78, %v41, 0.0
  %v132 = vadd.f32 %v40, %v131
  %133 = vadd.xlane.f32.xlu0 %v132
  %v134 = vpop.xlane.xlu0 %133
  %v135 = vsel %vm78, %v43, 0.0
  %v136 = vadd.f32 %v42, %v135
  %137 = vadd.xlane.f32.xlu0 %v136
  %v138 = vpop.xlane.xlu0 %137
  %v139 = vsel %vm78, %v45, 0.0
  %v140 = vadd.f32 %v44, %v139
  %141 = vadd.xlane.f32.xlu0 %v140
  %v142 = vpop.xlane.xlu0 %141
  %v143 = vsel %vm78, %v47, 0.0
  %v144 = vadd.f32 %v46, %v143
  %145 = vadd.xlane.f32.xlu0 %v144
  %v146 = vpop.xlane.xlu0 %145
  %v147 = vsel %vm78, %v49, 0.0
  %v148 = vadd.f32 %v48, %v147
  %149 = vadd.xlane.f32.xlu0 %v148
  %v150 = vpop.xlane.xlu0 %149
  %v151 = vsel %vm78, %v51, 0.0
  %v152 = vadd.f32 %v50, %v151
  %153 = vadd.xlane.f32.xlu0 %v152
  %v154 = vpop.xlane.xlu0 %153
  %v155 = vsel %vm78, %v53, 0.0
  %v156 = vadd.f32 %v52, %v155
  %157 = vadd.xlane.f32.xlu0 %v156
  %v158 = vpop.xlane.xlu0 %157
  %v159 = vsel %vm78, %v55, 0.0
  %v160 = vadd.f32 %v54, %v159
  %161 = vadd.xlane.f32.xlu0 %v160
  %v162 = vpop.xlane.xlu0 %161
  %v163 = vsel %vm78, %v57, 0.0
  %v164 = vadd.f32 %v56, %v163
  %165 = vadd.xlane.f32.xlu0 %v164
  %v166 = vpop.xlane.xlu0 %165
  %v167 = vsel %vm78, %v59, 0.0
  %v168 = vadd.f32 %v58, %v167
  %169 = vadd.xlane.f32.xlu0 %v168
  %v170 = vpop.xlane.xlu0 %169
  %v171 = vsel %vm78, %v61, 0.0
  %v172 = vadd.f32 %v60, %v171
  %173 = vadd.xlane.f32.xlu0 %v172
  %v174 = vpop.xlane.xlu0 %173
  %v175 = vsel %vm78, %v63, 0.0
  %v176 = vadd.f32 %v62, %v175
  %177 = vadd.xlane.f32.xlu0 %v176
  %v178 = vpop.xlane.xlu0 %177
  %v179 = vsel %vm78, %v65, 0.0
  %v180 = vadd.f32 %v64, %v179
  %181 = vadd.xlane.f32.xlu0 %v180
  %v182 = vpop.xlane.xlu0 %181
  %v183 = vsel %vm78, %v67, 0.0
  %v184 = vadd.f32 %v66, %v183
  %185 = vadd.xlane.f32.xlu0 %v184
  %v186 = vpop.xlane.xlu0 %185
  %v187 = vsel %vm78, %v69, 0.0
  %v188 = vadd.f32 %v68, %v187
  %189 = vadd.xlane.f32.xlu0 %v188
  %v190 = vpop.xlane.xlu0 %189
  %v191 = vsel %vm78, %v71, 0.0
  %v192 = vadd.f32 %v70, %v191
  %193 = vadd.xlane.f32.xlu0 %v192
  %v194 = vpop.xlane.xlu0 %193
  %v195 = vsel %vm78, %v73, 0.0
  %v196 = vadd.f32 %v72, %v195
  %197 = vadd.xlane.f32.xlu0 %v196
  %v198 = vpop.xlane.xlu0 %197
  %v199 = vsel %vm78, %v75, 0.0
  %v200 = vadd.f32 %v74, %v199
  %201 = vadd.xlane.f32.xlu0 %v200
  %v202 = vpop.xlane.xlu0 %201
  %v203 = vsel %vm78, %v77, 0.0
  %v204 = vadd.f32 %v76, %v203
  %205 = vadd.xlane.f32.xlu0 %v204
  %v206 = vpop.xlane.xlu0 %205
  %v207 = vmul.f32 %v82, 0.0051020407
  %v208 = vmul.f32 %v86, 0.0051020407
  %v209 = vmul.f32 %v90, 0.0051020407
  %v210 = vmul.f32 %v94, 0.0051020407
  %v211 = vmul.f32 %v98, 0.0051020407
  %v212 = vmul.f32 %v102, 0.0051020407
  %v213 = vmul.f32 %v106, 0.0051020407
  %v214 = vmul.f32 %v110, 0.0051020407
  %v215 = vmul.f32 %v114, 0.0051020407
  %v216 = vmul.f32 %v118, 0.0051020407
  %v217 = vmul.f32 %v122, 0.0051020407
  %v218 = vmul.f32 %v126, 0.0051020407
  %v219 = vmul.f32 %v130, 0.0051020407
  %v220 = vmul.f32 %v134, 0.0051020407
  %v221 = vmul.f32 %v138, 0.0051020407
  %v222 = vmul.f32 %v142, 0.0051020407
  %v223 = vmul.f32 %v146, 0.0051020407
  %v224 = vmul.f32 %v150, 0.0051020407
  %v225 = vmul.f32 %v154, 0.0051020407
  %v226 = vmul.f32 %v158, 0.0051020407
  %v227 = vmul.f32 %v162, 0.0051020407
  %v228 = vmul.f32 %v166, 0.0051020407
  %v229 = vmul.f32 %v170, 0.0051020407
  %v230 = vmul.f32 %v174, 0.0051020407
  %v231 = vmul.f32 %v178, 0.0051020407
  %v232 = vmul.f32 %v182, 0.0051020407
  %v233 = vmul.f32 %v186, 0.0051020407
  %v234 = vmul.f32 %v190, 0.0051020407
  %v235 = vmul.f32 %v194, 0.0051020407
  %v236 = vmul.f32 %v198, 0.0051020407
  %v237 = vmul.f32 %v202, 0.0051020407
  %v238 = vmul.f32 %v206, 0.0051020407
  %v239 = vmul.f32 %v14, %v14
  %v240 = vmul.f32 %v15, %v15
  %v241 = vmul.f32 %v16, %v16
  %v242 = vmul.f32 %v17, %v17
  %v243 = vmul.f32 %v18, %v18
  %v244 = vmul.f32 %v19, %v19
  %v245 = vmul.f32 %v20, %v20
  %v246 = vmul.f32 %v21, %v21
  %v247 = vmul.f32 %v22, %v22
  %v248 = vmul.f32 %v23, %v23
  %v249 = vmul.f32 %v24, %v24
  %v250 = vmul.f32 %v25, %v25
  %v251 = vmul.f32 %v26, %v26
  %v252 = vmul.f32 %v27, %v27
  %v253 = vmul.f32 %v28, %v28
  %v254 = vmul.f32 %v29, %v29
  %v255 = vmul.f32 %v30, %v30
  %v256 = vmul.f32 %v31, %v31
  %v257 = vmul.f32 %v32, %v32
  %v258 = vmul.f32 %v33, %v33
  %v259 = vmul.f32 %v34, %v34
  %v260 = vmul.f32 %v35, %v35
  %v261 = vmul.f32 %v36, %v36
  %v262 = vmul.f32 %v37, %v37
  %v263 = vmul.f32 %v38, %v38
  %v264 = vmul.f32 %v39, %v39
  %v265 = vmul.f32 %v40, %v40
  %v266 = vmul.f32 %v41, %v41
  %v267 = vmul.f32 %v42, %v42
  %v268 = vmul.f32 %v43, %v43
  %v269 = vmul.f32 %v44, %v44
  %v270 = vmul.f32 %v45, %v45
  %v271 = vmul.f32 %v46, %v46
  %v272 = vmul.f32 %v47, %v47
  %v273 = vmul.f32 %v48, %v48
  %v274 = vmul.f32 %v49, %v49
  %v275 = vmul.f32 %v50, %v50
  %v276 = vmul.f32 %v51, %v51
  %v277 = vmul.f32 %v52, %v52
  %v278 = vmul.f32 %v53, %v53
  %v279 = vmul.f32 %v54, %v54
  %v280 = vmul.f32 %v55, %v55
  %v281 = vmul.f32 %v56, %v56
  %v282 = vmul.f32 %v57, %v57
  %v283 = vmul.f32 %v58, %v58
  %v284 = vmul.f32 %v59, %v59
  %v285 = vmul.f32 %v60, %v60
  %v286 = vmul.f32 %v61, %v61
  %v287 = vmul.f32 %v62, %v62
  %v288 = vmul.f32 %v63, %v63
  %v289 = vmul.f32 %v64, %v64
  %v290 = vmul.f32 %v65, %v65
  %v291 = vmul.f32 %v66, %v66
  %v292 = vmul.f32 %v67, %v67
  %v293 = vmul.f32 %v68, %v68
  %v294 = vmul.f32 %v69, %v69
  %v295 = vmul.f32 %v70, %v70
  %v296 = vmul.f32 %v71, %v71
  %v297 = vmul.f32 %v72, %v72
  %v298 = vmul.f32 %v73, %v73
  %v299 = vmul.f32 %v74, %v74
  %v300 = vmul.f32 %v75, %v75
  %v301 = vmul.f32 %v76, %v76
  %v302 = vmul.f32 %v77, %v77
  %v303 = vsel %vm78, %v240, 0.0
  %v304 = vadd.f32 %v239, %v303
  %305 = vadd.xlane.f32.xlu0 %v304
  %v306 = vpop.xlane.xlu0 %305
  %v307 = vsel %vm78, %v242, 0.0
  %v308 = vadd.f32 %v241, %v307
  %309 = vadd.xlane.f32.xlu0 %v308
  %v310 = vpop.xlane.xlu0 %309
  %v311 = vsel %vm78, %v244, 0.0
  %v312 = vadd.f32 %v243, %v311
  %313 = vadd.xlane.f32.xlu0 %v312
  %v314 = vpop.xlane.xlu0 %313
  %v315 = vsel %vm78, %v246, 0.0
  %v316 = vadd.f32 %v245, %v315
  %317 = vadd.xlane.f32.xlu0 %v316
  %v318 = vpop.xlane.xlu0 %317
  %v319 = vsel %vm78, %v248, 0.0
  %v320 = vadd.f32 %v247, %v319
  %321 = vadd.xlane.f32.xlu0 %v320
  %v322 = vpop.xlane.xlu0 %321
  %v323 = vsel %vm78, %v250, 0.0
  %v324 = vadd.f32 %v249, %v323
  %325 = vadd.xlane.f32.xlu0 %v324
  %v326 = vpop.xlane.xlu0 %325
  %v327 = vsel %vm78, %v252, 0.0
  %v328 = vadd.f32 %v251, %v327
  %329 = vadd.xlane.f32.xlu0 %v328
  %v330 = vpop.xlane.xlu0 %329
  %v331 = vsel %vm78, %v254, 0.0
  %v332 = vadd.f32 %v253, %v331
  %333 = vadd.xlane.f32.xlu0 %v332
  %v334 = vpop.xlane.xlu0 %333
  %v335 = vsel %vm78, %v256, 0.0
  %v336 = vadd.f32 %v255, %v335
  %337 = vadd.xlane.f32.xlu0 %v336
  %v338 = vpop.xlane.xlu0 %337
  %v339 = vsel %vm78, %v258, 0.0
  %v340 = vadd.f32 %v257, %v339
  %341 = vadd.xlane.f32.xlu0 %v340
  %v342 = vpop.xlane.xlu0 %341
  %v343 = vsel %vm78, %v260, 0.0
  %v344 = vadd.f32 %v259, %v343
  %345 = vadd.xlane.f32.xlu0 %v344
  %v346 = vpop.xlane.xlu0 %345
  %v347 = vsel %vm78, %v262, 0.0
  %v348 = vadd.f32 %v261, %v347
  %349 = vadd.xlane.f32.xlu0 %v348
  %v350 = vpop.xlane.xlu0 %349
  %v351 = vsel %vm78, %v264, 0.0
  %v352 = vadd.f32 %v263, %v351
  %353 = vadd.xlane.f32.xlu0 %v352
  %v354 = vpop.xlane.xlu0 %353
  %v355 = vsel %vm78, %v266, 0.0
  %v356 = vadd.f32 %v265, %v355
  %357 = vadd.xlane.f32.xlu0 %v356
  %v358 = vpop.xlane.xlu0 %357
  %v359 = vsel %vm78, %v268, 0.0
  %v360 = vadd.f32 %v267, %v359
  %361 = vadd.xlane.f32.xlu0 %v360
  %v362 = vpop.xlane.xlu0 %361
  %v363 = vsel %vm78, %v270, 0.0
  %v364 = vadd.f32 %v269, %v363
  %365 = vadd.xlane.f32.xlu0 %v364
  %v366 = vpop.xlane.xlu0 %365
  %v367 = vsel %vm78, %v272, 0.0
  %v368 = vadd.f32 %v271, %v367
  %369 = vadd.xlane.f32.xlu0 %v368
  %v370 = vpop.xlane.xlu0 %369
  %v371 = vsel %vm78, %v274, 0.0
  %v372 = vadd.f32 %v273, %v371
  %373 = vadd.xlane.f32.xlu0 %v372
  %v374 = vpop.xlane.xlu0 %373
  %v375 = vsel %vm78, %v276, 0.0
  %v376 = vadd.f32 %v275, %v375
  %377 = vadd.xlane.f32.xlu0 %v376
  %v378 = vpop.xlane.xlu0 %377
  %v379 = vsel %vm78, %v278, 0.0
  %v380 = vadd.f32 %v277, %v379
  %381 = vadd.xlane.f32.xlu0 %v380
  %v382 = vpop.xlane.xlu0 %381
  %v383 = vsel %vm78, %v280, 0.0
  %v384 = vadd.f32 %v279, %v383
  %385 = vadd.xlane.f32.xlu0 %v384
  %v386 = vpop.xlane.xlu0 %385
  %v387 = vsel %vm78, %v282, 0.0
  %v388 = vadd.f32 %v281, %v387
  %389 = vadd.xlane.f32.xlu0 %v388
  %v390 = vpop.xlane.xlu0 %389
  %v391 = vsel %vm78, %v284, 0.0
  %v392 = vadd.f32 %v283, %v391
  %393 = vadd.xlane.f32.xlu0 %v392
  %v394 = vpop.xlane.xlu0 %393
  %v395 = vsel %vm78, %v286, 0.0
  %v396 = vadd.f32 %v285, %v395
  %397 = vadd.xlane.f32.xlu0 %v396
  %v398 = vpop.xlane.xlu0 %397
  %v399 = vsel %vm78, %v288, 0.0
  %v400 = vadd.f32 %v287, %v399
  %401 = vadd.xlane.f32.xlu0 %v400
  %v402 = vpop.xlane.xlu0 %401
  %v403 = vsel %vm78, %v290, 0.0
  %v404 = vadd.f32 %v289, %v403
  %405 = vadd.xlane.f32.xlu0 %v404
  %v406 = vpop.xlane.xlu0 %405
  %v407 = vsel %vm78, %v292, 0.0
  %v408 = vadd.f32 %v291, %v407
  %409 = vadd.xlane.f32.xlu0 %v408
  %v410 = vpop.xlane.xlu0 %409
  %v411 = vsel %vm78, %v294, 0.0
  %v412 = vadd.f32 %v293, %v411
  %413 = vadd.xlane.f32.xlu0 %v412
  %v414 = vpop.xlane.xlu0 %413
  %v415 = vsel %vm78, %v296, 0.0
  %v416 = vadd.f32 %v295, %v415
  %417 = vadd.xlane.f32.xlu0 %v416
  %v418 = vpop.xlane.xlu0 %417
  %v419 = vsel %vm78, %v298, 0.0
  %v420 = vadd.f32 %v297, %v419
  %421 = vadd.xlane.f32.xlu0 %v420
  %v422 = vpop.xlane.xlu0 %421
  %v423 = vsel %vm78, %v300, 0.0
  %v424 = vadd.f32 %v299, %v423
  %425 = vadd.xlane.f32.xlu0 %v424
  %v426 = vpop.xlane.xlu0 %425
  %v427 = vsel %vm78, %v302, 0.0
  %v428 = vadd.f32 %v301, %v427
  %429 = vadd.xlane.f32.xlu0 %v428
  %v430 = vpop.xlane.xlu0 %429
  %v431 = vmul.f32 %v306, 0.0051020407
  %v432 = vmul.f32 %v310, 0.0051020407
  %v433 = vmul.f32 %v314, 0.0051020407
  %v434 = vmul.f32 %v318, 0.0051020407
  %v435 = vmul.f32 %v322, 0.0051020407
  %v436 = vmul.f32 %v326, 0.0051020407
  %v437 = vmul.f32 %v330, 0.0051020407
  %v438 = vmul.f32 %v334, 0.0051020407
  %v439 = vmul.f32 %v338, 0.0051020407
  %v440 = vmul.f32 %v342, 0.0051020407
  %v441 = vmul.f32 %v346, 0.0051020407
  %v442 = vmul.f32 %v350, 0.0051020407
  %v443 = vmul.f32 %v354, 0.0051020407
  %v444 = vmul.f32 %v358, 0.0051020407
  %v445 = vmul.f32 %v362, 0.0051020407
  %v446 = vmul.f32 %v366, 0.0051020407
  %v447 = vmul.f32 %v370, 0.0051020407
  %v448 = vmul.f32 %v374, 0.0051020407
  %v449 = vmul.f32 %v378, 0.0051020407
  %v450 = vmul.f32 %v382, 0.0051020407
  %v451 = vmul.f32 %v386, 0.0051020407
  %v452 = vmul.f32 %v390, 0.0051020407
  %v453 = vmul.f32 %v394, 0.0051020407
  %v454 = vmul.f32 %v398, 0.0051020407
  %v455 = vmul.f32 %v402, 0.0051020407
  %v456 = vmul.f32 %v406, 0.0051020407
  %v457 = vmul.f32 %v410, 0.0051020407
  %v458 = vmul.f32 %v414, 0.0051020407
  %v459 = vmul.f32 %v418, 0.0051020407
  %v460 = vmul.f32 %v422, 0.0051020407
  %v461 = vmul.f32 %v426, 0.0051020407
  %v462 = vmul.f32 %v430, 0.0051020407
  %v463 = vmul.f32 %v207, %v207
  %v464 = vmul.f32 %v208, %v208
  %v465 = vmul.f32 %v209, %v209
  %v466 = vmul.f32 %v210, %v210
  %v467 = vmul.f32 %v211, %v211
  %v468 = vmul.f32 %v212, %v212
  %v469 = vmul.f32 %v213, %v213
  %v470 = vmul.f32 %v214, %v214
  %v471 = vmul.f32 %v215, %v215
  %v472 = vmul.f32 %v216, %v216
  %v473 = vmul.f32 %v217, %v217
  %v474 = vmul.f32 %v218, %v218
  %v475 = vmul.f32 %v219, %v219
  %v476 = vmul.f32 %v220, %v220
  %v477 = vmul.f32 %v221, %v221
  %v478 = vmul.f32 %v222, %v222
  %v479 = vmul.f32 %v223, %v223
  %v480 = vmul.f32 %v224, %v224
  %v481 = vmul.f32 %v225, %v225
  %v482 = vmul.f32 %v226, %v226
  %v483 = vmul.f32 %v227, %v227
  %v484 = vmul.f32 %v228, %v228
  %v485 = vmul.f32 %v229, %v229
  %v486 = vmul.f32 %v230, %v230
  %v487 = vmul.f32 %v231, %v231
  %v488 = vmul.f32 %v232, %v232
  %v489 = vmul.f32 %v233, %v233
  %v490 = vmul.f32 %v234, %v234
  %v491 = vmul.f32 %v235, %v235
  %v492 = vmul.f32 %v236, %v236
  %v493 = vmul.f32 %v237, %v237
  %v494 = vmul.f32 %v238, %v238
  %v495 = vsub.f32 %v431, %v463
  %v496 = vsub.f32 %v432, %v464
  %v497 = vsub.f32 %v433, %v465
  %v498 = vsub.f32 %v434, %v466
  %v499 = vsub.f32 %v435, %v467
  %v500 = vsub.f32 %v436, %v468
  %v501 = vsub.f32 %v437, %v469
  %v502 = vsub.f32 %v438, %v470
  %v503 = vsub.f32 %v439, %v471
  %v504 = vsub.f32 %v440, %v472
  %v505 = vsub.f32 %v441, %v473
  %v506 = vsub.f32 %v442, %v474
  %v507 = vsub.f32 %v443, %v475
  %v508 = vsub.f32 %v444, %v476
  %v509 = vsub.f32 %v445, %v477
  %v510 = vsub.f32 %v446, %v478
  %v511 = vsub.f32 %v447, %v479
  %v512 = vsub.f32 %v448, %v480
  %v513 = vsub.f32 %v449, %v481
  %v514 = vsub.f32 %v450, %v482
  %v515 = vsub.f32 %v451, %v483
  %v516 = vsub.f32 %v452, %v484
  %v517 = vsub.f32 %v453, %v485
  %v518 = vsub.f32 %v454, %v486
  %v519 = vsub.f32 %v455, %v487
  %v520 = vsub.f32 %v456, %v488
  %v521 = vsub.f32 %v457, %v489
  %v522 = vsub.f32 %v458, %v490
  %v523 = vsub.f32 %v459, %v491
  %v524 = vsub.f32 %v460, %v492
  %v525 = vsub.f32 %v461, %v493
  %v526 = vsub.f32 %v462, %v494
  %v527 = vmax.f32 %v495, 0.0
  %v528 = vmax.f32 %v496, 0.0
  %v529 = vmax.f32 %v497, 0.0
  %v530 = vmax.f32 %v498, 0.0
  %v531 = vmax.f32 %v499, 0.0
  %v532 = vmax.f32 %v500, 0.0
  %v533 = vmax.f32 %v501, 0.0
  %v534 = vmax.f32 %v502, 0.0
  %v535 = vmax.f32 %v503, 0.0
  %v536 = vmax.f32 %v504, 0.0
  %v537 = vmax.f32 %v505, 0.0
  %v538 = vmax.f32 %v506, 0.0
  %v539 = vmax.f32 %v507, 0.0
  %v540 = vmax.f32 %v508, 0.0
  %v541 = vmax.f32 %v509, 0.0
  %v542 = vmax.f32 %v510, 0.0
  %v543 = vmax.f32 %v511, 0.0
  %v544 = vmax.f32 %v512, 0.0
  %v545 = vmax.f32 %v513, 0.0
  %v546 = vmax.f32 %v514, 0.0
  %v547 = vmax.f32 %v515, 0.0
  %v548 = vmax.f32 %v516, 0.0
  %v549 = vmax.f32 %v517, 0.0
  %v550 = vmax.f32 %v518, 0.0
  %v551 = vmax.f32 %v519, 0.0
  %v552 = vmax.f32 %v520, 0.0
  %v553 = vmax.f32 %v521, 0.0
  %v554 = vmax.f32 %v522, 0.0
  %v555 = vmax.f32 %v523, 0.0
  %v556 = vmax.f32 %v524, 0.0
  %v557 = vmax.f32 %v525, 0.0
  %v558 = vmax.f32 %v526, 0.0
  %v559 = vld [vmem:[%s1] sm:$0xff]
  %v560 = vld [vmem:[%s1 + $0x8] sm:$0xff]
  %v561 = vld [vmem:[%s1 + $0x10] sm:$0xff]
  %v562 = vld [vmem:[%s1 + $0x18] sm:$0xff]
  %v563 = vld [vmem:[%s1 + $0x20] sm:$0xff]
  %v564 = vld [vmem:[%s1 + $0x28] sm:$0xff]
  %v565 = vld [vmem:[%s1 + $0x30] sm:$0xff]
  %v566 = vld [vmem:[%s1 + $0x38] sm:$0xff]
  %v567 = vld [vmem:[%s1 + $0x40] sm:$0xff]
  %v568 = vld [vmem:[%s1 + $0x48] sm:$0xff]
  %v569 = vld [vmem:[%s1 + $0x50] sm:$0xff]
  %v570 = vld [vmem:[%s1 + $0x58] sm:$0xff]
  %v571 = vld [vmem:[%s1 + $0x60] sm:$0xff]
  %v572 = vld [vmem:[%s1 + $0x68] sm:$0xff]
  %v573 = vld [vmem:[%s1 + $0x70] sm:$0xff]
  %v574 = vld [vmem:[%s1 + $0x78] sm:$0xff]
  %v575 = vld [vmem:[%s1 + $0x80] sm:$0xff]
  %v576 = vld [vmem:[%s1 + $0x88] sm:$0xff]
  %v577 = vld [vmem:[%s1 + $0x90] sm:$0xff]
  %v578 = vld [vmem:[%s1 + $0x98] sm:$0xff]
  %v579 = vld [vmem:[%s1 + $0xa0] sm:$0xff]
  %v580 = vld [vmem:[%s1 + $0xa8] sm:$0xff]
  %v581 = vld [vmem:[%s1 + $0xb0] sm:$0xff]
  %v582 = vld [vmem:[%s1 + $0xb8] sm:$0xff]
  %v583 = vld [vmem:[%s1 + $0xc0] sm:$0xff]
  %v584 = vld [vmem:[%s1 + $0xc8] sm:$0xff]
  %v585 = vld [vmem:[%s1 + $0xd0] sm:$0xff]
  %v586 = vld [vmem:[%s1 + $0xd8] sm:$0xff]
  %v587 = vld [vmem:[%s1 + $0xe0] sm:$0xff]
  %v588 = vld [vmem:[%s1 + $0xe8] sm:$0xff]
  %v589 = vld [vmem:[%s1 + $0xf0] sm:$0xff]
  %v590 = vld [vmem:[%s1 + $0xf8] sm:$0xff]
  %v591 = vadd.f32 %v527, 1e-05
  %v592 = vadd.f32 %v528, 1e-05
  %v593 = vadd.f32 %v529, 1e-05
  %v594 = vadd.f32 %v530, 1e-05
  %v595 = vadd.f32 %v531, 1e-05
  %v596 = vadd.f32 %v532, 1e-05
  %v597 = vadd.f32 %v533, 1e-05
  %v598 = vadd.f32 %v534, 1e-05
  %v599 = vadd.f32 %v535, 1e-05
  %v600 = vadd.f32 %v536, 1e-05
  %v601 = vadd.f32 %v537, 1e-05
  %v602 = vadd.f32 %v538, 1e-05
  %v603 = vadd.f32 %v539, 1e-05
  %v604 = vadd.f32 %v540, 1e-05
  %v605 = vadd.f32 %v541, 1e-05
  %v606 = vadd.f32 %v542, 1e-05
  %v607 = vadd.f32 %v543, 1e-05
  %v608 = vadd.f32 %v544, 1e-05
  %v609 = vadd.f32 %v545, 1e-05
  %v610 = vadd.f32 %v546, 1e-05
  %v611 = vadd.f32 %v547, 1e-05
  %v612 = vadd.f32 %v548, 1e-05
  %v613 = vadd.f32 %v549, 1e-05
  %v614 = vadd.f32 %v550, 1e-05
  %v615 = vadd.f32 %v551, 1e-05
  %v616 = vadd.f32 %v552, 1e-05
  %v617 = vadd.f32 %v553, 1e-05
  %v618 = vadd.f32 %v554, 1e-05
  %v619 = vadd.f32 %v555, 1e-05
  %v620 = vadd.f32 %v556, 1e-05
  %v621 = vadd.f32 %v557, 1e-05
  %v622 = vadd.f32 %v558, 1e-05
  %v623 = vrsqrt.pop %v591
  %v624 = vmul.f32 %v623, %v591
  %v625 = vmul.f32 %v624, %v623
  %v626 = vmul.f32 0.5, %v625
  %v627 = vsub.f32 1.5, %v626
  %v628 = vmul.f32 %v623, %v627
  %vm629 = vweird.f32 %v591
  %vm630 = vweird.f32 %v623
  %vm631 = vmor %vm629, %vm630
  %v632 = vsel %vm631, %v623, %v628
  %v633 = vrsqrt.pop %v592
  %v634 = vmul.f32 %v633, %v592
  %v635 = vmul.f32 %v634, %v633
  %v636 = vmul.f32 0.5, %v635
  %v637 = vsub.f32 1.5, %v636
  %v638 = vmul.f32 %v633, %v637
  %vm639 = vweird.f32 %v592
  %vm640 = vweird.f32 %v633
  %vm641 = vmor %vm639, %vm640
  %v642 = vsel %vm641, %v633, %v638
  %v643 = vrsqrt.pop %v593
  %v644 = vmul.f32 %v643, %v593
  %v645 = vmul.f32 %v644, %v643
  %v646 = vmul.f32 0.5, %v645
  %v647 = vsub.f32 1.5, %v646
  %v648 = vmul.f32 %v643, %v647
  %vm649 = vweird.f32 %v593
  %vm650 = vweird.f32 %v643
  %vm651 = vmor %vm649, %vm650
  %v652 = vsel %vm651, %v643, %v648
  %v653 = vrsqrt.pop %v594
  %v654 = vmul.f32 %v653, %v594
  %v655 = vmul.f32 %v654, %v653
  %v656 = vmul.f32 0.5, %v655
  %v657 = vsub.f32 1.5, %v656
  %v658 = vmul.f32 %v653, %v657
  %vm659 = vweird.f32 %v594
  %vm660 = vweird.f32 %v653
  %vm661 = vmor %vm659, %vm660
  %v662 = vsel %vm661, %v653, %v658
  %v663 = vrsqrt.pop %v595
  %v664 = vmul.f32 %v663, %v595
  %v665 = vmul.f32 %v664, %v663
  %v666 = vmul.f32 0.5, %v665
  %v667 = vsub.f32 1.5, %v666
  %v668 = vmul.f32 %v663, %v667
  %vm669 = vweird.f32 %v595
  %vm670 = vweird.f32 %v663
  %vm671 = vmor %vm669, %vm670
  %v672 = vsel %vm671, %v663, %v668
  %v673 = vrsqrt.pop %v596
  %v674 = vmul.f32 %v673, %v596
  %v675 = vmul.f32 %v674, %v673
  %v676 = vmul.f32 0.5, %v675
  %v677 = vsub.f32 1.5, %v676
  %v678 = vmul.f32 %v673, %v677
  %vm679 = vweird.f32 %v596
  %vm680 = vweird.f32 %v673
  %vm681 = vmor %vm679, %vm680
  %v682 = vsel %vm681, %v673, %v678
  %v683 = vrsqrt.pop %v597
  %v684 = vmul.f32 %v683, %v597
  %v685 = vmul.f32 %v684, %v683
  %v686 = vmul.f32 0.5, %v685
  %v687 = vsub.f32 1.5, %v686
  %v688 = vmul.f32 %v683, %v687
  %vm689 = vweird.f32 %v597
  %vm690 = vweird.f32 %v683
  %vm691 = vmor %vm689, %vm690
  %v692 = vsel %vm691, %v683, %v688
  %v693 = vrsqrt.pop %v598
  %v694 = vmul.f32 %v693, %v598
  %v695 = vmul.f32 %v694, %v693
  %v696 = vmul.f32 0.5, %v695
  %v697 = vsub.f32 1.5, %v696
  %v698 = vmul.f32 %v693, %v697
  %vm699 = vweird.f32 %v598
  %vm700 = vweird.f32 %v693
  %vm701 = vmor %vm699, %vm700
  %v702 = vsel %vm701, %v693, %v698
  %v703 = vrsqrt.pop %v599
  %v704 = vmul.f32 %v703, %v599
  %v705 = vmul.f32 %v704, %v703
  %v706 = vmul.f32 0.5, %v705
  %v707 = vsub.f32 1.5, %v706
  %v708 = vmul.f32 %v703, %v707
  %vm709 = vweird.f32 %v599
  %vm710 = vweird.f32 %v703
  %vm711 = vmor %vm709, %vm710
  %v712 = vsel %vm711, %v703, %v708
  %v713 = vrsqrt.pop %v600
  %v714 = vmul.f32 %v713, %v600
  %v715 = vmul.f32 %v714, %v713
  %v716 = vmul.f32 0.5, %v715
  %v717 = vsub.f32 1.5, %v716
  %v718 = vmul.f32 %v713, %v717
  %vm719 = vweird.f32 %v600
  %vm720 = vweird.f32 %v713
  %vm721 = vmor %vm719, %vm720
  %v722 = vsel %vm721, %v713, %v718
  %v723 = vrsqrt.pop %v601
  %v724 = vmul.f32 %v723, %v601
  %v725 = vmul.f32 %v724, %v723
  %v726 = vmul.f32 0.5, %v725
  %v727 = vsub.f32 1.5, %v726
  %v728 = vmul.f32 %v723, %v727
  %vm729 = vweird.f32 %v601
  %vm730 = vweird.f32 %v723
  %vm731 = vmor %vm729, %vm730
  %v732 = vsel %vm731, %v723, %v728
  %v733 = vrsqrt.pop %v602
  %v734 = vmul.f32 %v733, %v602
  %v735 = vmul.f32 %v734, %v733
  %v736 = vmul.f32 0.5, %v735
  %v737 = vsub.f32 1.5, %v736
  %v738 = vmul.f32 %v733, %v737
  %vm739 = vweird.f32 %v602
  %vm740 = vweird.f32 %v733
  %vm741 = vmor %vm739, %vm740
  %v742 = vsel %vm741, %v733, %v738
  %v743 = vrsqrt.pop %v603
  %v744 = vmul.f32 %v743, %v603
  %v745 = vmul.f32 %v744, %v743
  %v746 = vmul.f32 0.5, %v745
  %v747 = vsub.f32 1.5, %v746
  %v748 = vmul.f32 %v743, %v747
  %vm749 = vweird.f32 %v603
  %vm750 = vweird.f32 %v743
  %vm751 = vmor %vm749, %vm750
  %v752 = vsel %vm751, %v743, %v748
  %v753 = vrsqrt.pop %v604
  %v754 = vmul.f32 %v753, %v604
  %v755 = vmul.f32 %v754, %v753
  %v756 = vmul.f32 0.5, %v755
  %v757 = vsub.f32 1.5, %v756
  %v758 = vmul.f32 %v753, %v757
  %vm759 = vweird.f32 %v604
  %vm760 = vweird.f32 %v753
  %vm761 = vmor %vm759, %vm760
  %v762 = vsel %vm761, %v753, %v758
  %v763 = vrsqrt.pop %v605
  %v764 = vmul.f32 %v763, %v605
  %v765 = vmul.f32 %v764, %v763
  %v766 = vmul.f32 0.5, %v765
  %v767 = vsub.f32 1.5, %v766
  %v768 = vmul.f32 %v763, %v767
  %vm769 = vweird.f32 %v605
  %vm770 = vweird.f32 %v763
  %vm771 = vmor %vm769, %vm770
  %v772 = vsel %vm771, %v763, %v768
  %v773 = vrsqrt.pop %v606
  %v774 = vmul.f32 %v773, %v606
  %v775 = vmul.f32 %v774, %v773
  %v776 = vmul.f32 0.5, %v775
  %v777 = vsub.f32 1.5, %v776
  %v778 = vmul.f32 %v773, %v777
  %vm779 = vweird.f32 %v606
  %vm780 = vweird.f32 %v773
  %vm781 = vmor %vm779, %vm780
  %v782 = vsel %vm781, %v773, %v778
  %v783 = vrsqrt.pop %v607
  %v784 = vmul.f32 %v783, %v607
  %v785 = vmul.f32 %v784, %v783
  %v786 = vmul.f32 0.5, %v785
  %v787 = vsub.f32 1.5, %v786
  %v788 = vmul.f32 %v783, %v787
  %vm789 = vweird.f32 %v607
  %vm790 = vweird.f32 %v783
  %vm791 = vmor %vm789, %vm790
  %v792 = vsel %vm791, %v783, %v788
  %v793 = vrsqrt.pop %v608
  %v794 = vmul.f32 %v793, %v608
  %v795 = vmul.f32 %v794, %v793
  %v796 = vmul.f32 0.5, %v795
  %v797 = vsub.f32 1.5, %v796
  %v798 = vmul.f32 %v793, %v797
  %vm799 = vweird.f32 %v608
  %vm800 = vweird.f32 %v793
  %vm801 = vmor %vm799, %vm800
  %v802 = vsel %vm801, %v793, %v798
  %v803 = vrsqrt.pop %v609
  %v804 = vmul.f32 %v803, %v609
  %v805 = vmul.f32 %v804, %v803
  %v806 = vmul.f32 0.5, %v805
  %v807 = vsub.f32 1.5, %v806
  %v808 = vmul.f32 %v803, %v807
  %vm809 = vweird.f32 %v609
  %vm810 = vweird.f32 %v803
  %vm811 = vmor %vm809, %vm810
  %v812 = vsel %vm811, %v803, %v808
  %v813 = vrsqrt.pop %v610
  %v814 = vmul.f32 %v813, %v610
  %v815 = vmul.f32 %v814, %v813
  %v816 = vmul.f32 0.5, %v815
  %v817 = vsub.f32 1.5, %v816
  %v818 = vmul.f32 %v813, %v817
  %vm819 = vweird.f32 %v610
  %vm820 = vweird.f32 %v813
  %vm821 = vmor %vm819, %vm820
  %v822 = vsel %vm821, %v813, %v818
  %v823 = vrsqrt.pop %v611
  %v824 = vmul.f32 %v823, %v611
  %v825 = vmul.f32 %v824, %v823
  %v826 = vmul.f32 0.5, %v825
  %v827 = vsub.f32 1.5, %v826
  %v828 = vmul.f32 %v823, %v827
  %vm829 = vweird.f32 %v611
  %vm830 = vweird.f32 %v823
  %vm831 = vmor %vm829, %vm830
  %v832 = vsel %vm831, %v823, %v828
  %v833 = vrsqrt.pop %v612
  %v834 = vmul.f32 %v833, %v612
  %v835 = vmul.f32 %v834, %v833
  %v836 = vmul.f32 0.5, %v835
  %v837 = vsub.f32 1.5, %v836
  %v838 = vmul.f32 %v833, %v837
  %vm839 = vweird.f32 %v612
  %vm840 = vweird.f32 %v833
  %vm841 = vmor %vm839, %vm840
  %v842 = vsel %vm841, %v833, %v838
  %v843 = vrsqrt.pop %v613
  %v844 = vmul.f32 %v843, %v613
  %v845 = vmul.f32 %v844, %v843
  %v846 = vmul.f32 0.5, %v845
  %v847 = vsub.f32 1.5, %v846
  %v848 = vmul.f32 %v843, %v847
  %vm849 = vweird.f32 %v613
  %vm850 = vweird.f32 %v843
  %vm851 = vmor %vm849, %vm850
  %v852 = vsel %vm851, %v843, %v848
  %v853 = vrsqrt.pop %v614
  %v854 = vmul.f32 %v853, %v614
  %v855 = vmul.f32 %v854, %v853
  %v856 = vmul.f32 0.5, %v855
  %v857 = vsub.f32 1.5, %v856
  %v858 = vmul.f32 %v853, %v857
  %vm859 = vweird.f32 %v614
  %vm860 = vweird.f32 %v853
  %vm861 = vmor %vm859, %vm860
  %v862 = vsel %vm861, %v853, %v858
  %v863 = vrsqrt.pop %v615
  %v864 = vmul.f32 %v863, %v615
  %v865 = vmul.f32 %v864, %v863
  %v866 = vmul.f32 0.5, %v865
  %v867 = vsub.f32 1.5, %v866
  %v868 = vmul.f32 %v863, %v867
  %vm869 = vweird.f32 %v615
  %vm870 = vweird.f32 %v863
  %vm871 = vmor %vm869, %vm870
  %v872 = vsel %vm871, %v863, %v868
  %v873 = vrsqrt.pop %v616
  %v874 = vmul.f32 %v873, %v616
  %v875 = vmul.f32 %v874, %v873
  %v876 = vmul.f32 0.5, %v875
  %v877 = vsub.f32 1.5, %v876
  %v878 = vmul.f32 %v873, %v877
  %vm879 = vweird.f32 %v616
  %vm880 = vweird.f32 %v873
  %vm881 = vmor %vm879, %vm880
  %v882 = vsel %vm881, %v873, %v878
  %v883 = vrsqrt.pop %v617
  %v884 = vmul.f32 %v883, %v617
  %v885 = vmul.f32 %v884, %v883
  %v886 = vmul.f32 0.5, %v885
  %v887 = vsub.f32 1.5, %v886
  %v888 = vmul.f32 %v883, %v887
  %vm889 = vweird.f32 %v617
  %vm890 = vweird.f32 %v883
  %vm891 = vmor %vm889, %vm890
  %v892 = vsel %vm891, %v883, %v888
  %v893 = vrsqrt.pop %v618
  %v894 = vmul.f32 %v893, %v618
  %v895 = vmul.f32 %v894, %v893
  %v896 = vmul.f32 0.5, %v895
  %v897 = vsub.f32 1.5, %v896
  %v898 = vmul.f32 %v893, %v897
  %vm899 = vweird.f32 %v618
  %vm900 = vweird.f32 %v893
  %vm901 = vmor %vm899, %vm900
  %v902 = vsel %vm901, %v893, %v898
  %v903 = vrsqrt.pop %v619
  %v904 = vmul.f32 %v903, %v619
  %v905 = vmul.f32 %v904, %v903
  %v906 = vmul.f32 0.5, %v905
  %v907 = vsub.f32 1.5, %v906
  %v908 = vmul.f32 %v903, %v907
  %vm909 = vweird.f32 %v619
  %vm910 = vweird.f32 %v903
  %vm911 = vmor %vm909, %vm910
  %v912 = vsel %vm911, %v903, %v908
  %v913 = vrsqrt.pop %v620
  %v914 = vmul.f32 %v913, %v620
  %v915 = vmul.f32 %v914, %v913
  %v916 = vmul.f32 0.5, %v915
  %v917 = vsub.f32 1.5, %v916
  %v918 = vmul.f32 %v913, %v917
  %vm919 = vweird.f32 %v620
  %vm920 = vweird.f32 %v913
  %vm921 = vmor %vm919, %vm920
  %v922 = vsel %vm921, %v913, %v918
  %v923 = vrsqrt.pop %v621
  %v924 = vmul.f32 %v923, %v621
  %v925 = vmul.f32 %v924, %v923
  %v926 = vmul.f32 0.5, %v925
  %v927 = vsub.f32 1.5, %v926
  %v928 = vmul.f32 %v923, %v927
  %vm929 = vweird.f32 %v621
  %vm930 = vweird.f32 %v923
  %vm931 = vmor %vm929, %vm930
  %v932 = vsel %vm931, %v923, %v928
  %v933 = vrsqrt.pop %v622
  %v934 = vmul.f32 %v933, %v622
  %v935 = vmul.f32 %v934, %v933
  %v936 = vmul.f32 0.5, %v935
  %v937 = vsub.f32 1.5, %v936
  %v938 = vmul.f32 %v933, %v937
  %vm939 = vweird.f32 %v622
  %vm940 = vweird.f32 %v933
  %vm941 = vmor %vm939, %vm940
  %v942 = vsel %vm941, %v933, %v938
  %v943 = vmul.f32 %v559, %v632
  %v944 = vmul.f32 %v560, %v642
  %v945 = vmul.f32 %v561, %v652
  %v946 = vmul.f32 %v562, %v662
  %v947 = vmul.f32 %v563, %v672
  %v948 = vmul.f32 %v564, %v682
  %v949 = vmul.f32 %v565, %v692
  %v950 = vmul.f32 %v566, %v702
  %v951 = vmul.f32 %v567, %v712
  %v952 = vmul.f32 %v568, %v722
  %v953 = vmul.f32 %v569, %v732
  %v954 = vmul.f32 %v570, %v742
  %v955 = vmul.f32 %v571, %v752
  %v956 = vmul.f32 %v572, %v762
  %v957 = vmul.f32 %v573, %v772
  %v958 = vmul.f32 %v574, %v782
  %v959 = vmul.f32 %v575, %v792
  %v960 = vmul.f32 %v576, %v802
  %v961 = vmul.f32 %v577, %v812
  %v962 = vmul.f32 %v578, %v822
  %v963 = vmul.f32 %v579, %v832
  %v964 = vmul.f32 %v580, %v842
  %v965 = vmul.f32 %v581, %v852
  %v966 = vmul.f32 %v582, %v862
  %v967 = vmul.f32 %v583, %v872
  %v968 = vmul.f32 %v584, %v882
  %v969 = vmul.f32 %v585, %v892
  %v970 = vmul.f32 %v586, %v902
  %v971 = vmul.f32 %v587, %v912
  %v972 = vmul.f32 %v588, %v922
  %v973 = vmul.f32 %v589, %v932
  %v974 = vmul.f32 %v590, %v942
  %v975 = vld [vmem:[%s2] sm:$0xff]
  %v976 = vld [vmem:[%s2 + $0x8] sm:$0xff]
  %v977 = vld [vmem:[%s2 + $0x10] sm:$0xff]
  %v978 = vld [vmem:[%s2 + $0x18] sm:$0xff]
  %v979 = vld [vmem:[%s2 + $0x20] sm:$0xff]
  %v980 = vld [vmem:[%s2 + $0x28] sm:$0xff]
  %v981 = vld [vmem:[%s2 + $0x30] sm:$0xff]
  %v982 = vld [vmem:[%s2 + $0x38] sm:$0xff]
  %v983 = vld [vmem:[%s2 + $0x40] sm:$0xff]
  %v984 = vld [vmem:[%s2 + $0x48] sm:$0xff]
  %v985 = vld [vmem:[%s2 + $0x50] sm:$0xff]
  %v986 = vld [vmem:[%s2 + $0x58] sm:$0xff]
  %v987 = vld [vmem:[%s2 + $0x60] sm:$0xff]
  %v988 = vld [vmem:[%s2 + $0x68] sm:$0xff]
  %v989 = vld [vmem:[%s2 + $0x70] sm:$0xff]
  %v990 = vld [vmem:[%s2 + $0x78] sm:$0xff]
  %v991 = vld [vmem:[%s2 + $0x80] sm:$0xff]
  %v992 = vld [vmem:[%s2 + $0x88] sm:$0xff]
  %v993 = vld [vmem:[%s2 + $0x90] sm:$0xff]
  %v994 = vld [vmem:[%s2 + $0x98] sm:$0xff]
  %v995 = vld [vmem:[%s2 + $0xa0] sm:$0xff]
  %v996 = vld [vmem:[%s2 + $0xa8] sm:$0xff]
  %v997 = vld [vmem:[%s2 + $0xb0] sm:$0xff]
  %v998 = vld [vmem:[%s2 + $0xb8] sm:$0xff]
  %v999 = vld [vmem:[%s2 + $0xc0] sm:$0xff]
  %v1000 = vld [vmem:[%s2 + $0xc8] sm:$0xff]
  %v1001 = vld [vmem:[%s2 + $0xd0] sm:$0xff]
  %v1002 = vld [vmem:[%s2 + $0xd8] sm:$0xff]
  %v1003 = vld [vmem:[%s2 + $0xe0] sm:$0xff]
  %v1004 = vld [vmem:[%s2 + $0xe8] sm:$0xff]
  %v1005 = vld [vmem:[%s2 + $0xf0] sm:$0xff]
  %v1006 = vld [vmem:[%s2 + $0xf8] sm:$0xff]
  %v1007 = vmul.f32 %v207, %v943
  %v1008 = vmul.f32 %v208, %v944
  %v1009 = vmul.f32 %v209, %v945
  %v1010 = vmul.f32 %v210, %v946
  %v1011 = vmul.f32 %v211, %v947
  %v1012 = vmul.f32 %v212, %v948
  %v1013 = vmul.f32 %v213, %v949
  %v1014 = vmul.f32 %v214, %v950
  %v1015 = vmul.f32 %v215, %v951
  %v1016 = vmul.f32 %v216, %v952
  %v1017 = vmul.f32 %v217, %v953
  %v1018 = vmul.f32 %v218, %v954
  %v1019 = vmul.f32 %v219, %v955
  %v1020 = vmul.f32 %v220, %v956
  %v1021 = vmul.f32 %v221, %v957
  %v1022 = vmul.f32 %v222, %v958
  %v1023 = vmul.f32 %v223, %v959
  %v1024 = vmul.f32 %v224, %v960
  %v1025 = vmul.f32 %v225, %v961
  %v1026 = vmul.f32 %v226, %v962
  %v1027 = vmul.f32 %v227, %v963
  %v1028 = vmul.f32 %v228, %v964
  %v1029 = vmul.f32 %v229, %v965
  %v1030 = vmul.f32 %v230, %v966
  %v1031 = vmul.f32 %v231, %v967
  %v1032 = vmul.f32 %v232, %v968
  %v1033 = vmul.f32 %v233, %v969
  %v1034 = vmul.f32 %v234, %v970
  %v1035 = vmul.f32 %v235, %v971
  %v1036 = vmul.f32 %v236, %v972
  %v1037 = vmul.f32 %v237, %v973
  %v1038 = vmul.f32 %v238, %v974
  %v1039 = vsub.f32 %v975, %v1007
  %v1040 = vsub.f32 %v976, %v1008
  %v1041 = vsub.f32 %v977, %v1009
  %v1042 = vsub.f32 %v978, %v1010
  %v1043 = vsub.f32 %v979, %v1011
  %v1044 = vsub.f32 %v980, %v1012
  %v1045 = vsub.f32 %v981, %v1013
  %v1046 = vsub.f32 %v982, %v1014
  %v1047 = vsub.f32 %v983, %v1015
  %v1048 = vsub.f32 %v984, %v1016
  %v1049 = vsub.f32 %v985, %v1017
  %v1050 = vsub.f32 %v986, %v1018
  %v1051 = vsub.f32 %v987, %v1019
  %v1052 = vsub.f32 %v988, %v1020
  %v1053 = vsub.f32 %v989, %v1021
  %v1054 = vsub.f32 %v990, %v1022
  %v1055 = vsub.f32 %v991, %v1023
  %v1056 = vsub.f32 %v992, %v1024
  %v1057 = vsub.f32 %v993, %v1025
  %v1058 = vsub.f32 %v994, %v1026
  %v1059 = vsub.f32 %v995, %v1027
  %v1060 = vsub.f32 %v996, %v1028
  %v1061 = vsub.f32 %v997, %v1029
  %v1062 = vsub.f32 %v998, %v1030
  %v1063 = vsub.f32 %v999, %v1031
  %v1064 = vsub.f32 %v1000, %v1032
  %v1065 = vsub.f32 %v1001, %v1033
  %v1066 = vsub.f32 %v1002, %v1034
  %v1067 = vsub.f32 %v1003, %v1035
  %v1068 = vsub.f32 %v1004, %v1036
  %v1069 = vsub.f32 %v1005, %v1037
  %v1070 = vsub.f32 %v1006, %v1038
  %1072 = vset.pattern.permute.xlu0 0
  %1073 = vperm.xlu0 %1072, %v943
  %v1074 = vpop.permute.xlu0 %1073
  %1077 = vset.pattern.permute.xlu0 0
  %1078 = vperm.xlu0 %1077, %v944
  %v1079 = vpop.permute.xlu0 %1078
  %1082 = vset.pattern.permute.xlu0 0
  %1083 = vperm.xlu0 %1082, %v945
  %v1084 = vpop.permute.xlu0 %1083
  %1087 = vset.pattern.permute.xlu0 0
  %1088 = vperm.xlu0 %1087, %v946
  %v1089 = vpop.permute.xlu0 %1088
  %1092 = vset.pattern.permute.xlu0 0
  %1093 = vperm.xlu0 %1092, %v947
  %v1094 = vpop.permute.xlu0 %1093
  %1097 = vset.pattern.permute.xlu0 0
  %1098 = vperm.xlu0 %1097, %v948
  %v1099 = vpop.permute.xlu0 %1098
  %1102 = vset.pattern.permute.xlu0 0
  %1103 = vperm.xlu0 %1102, %v949
  %v1104 = vpop.permute.xlu0 %1103
  %1107 = vset.pattern.permute.xlu0 0
  %1108 = vperm.xlu0 %1107, %v950
  %v1109 = vpop.permute.xlu0 %1108
  %1112 = vset.pattern.permute.xlu0 0
  %1113 = vperm.xlu0 %1112, %v951
  %v1114 = vpop.permute.xlu0 %1113
  %1117 = vset.pattern.permute.xlu0 0
  %1118 = vperm.xlu0 %1117, %v952
  %v1119 = vpop.permute.xlu0 %1118
  %1122 = vset.pattern.permute.xlu0 0
  %1123 = vperm.xlu0 %1122, %v953
  %v1124 = vpop.permute.xlu0 %1123
  %1127 = vset.pattern.permute.xlu0 0
  %1128 = vperm.xlu0 %1127, %v954
  %v1129 = vpop.permute.xlu0 %1128
  %1132 = vset.pattern.permute.xlu0 0
  %1133 = vperm.xlu0 %1132, %v955
  %v1134 = vpop.permute.xlu0 %1133
  %1137 = vset.pattern.permute.xlu0 0
  %1138 = vperm.xlu0 %1137, %v956
  %v1139 = vpop.permute.xlu0 %1138
  %1142 = vset.pattern.permute.xlu0 0
  %1143 = vperm.xlu0 %1142, %v957
  %v1144 = vpop.permute.xlu0 %1143
  %1147 = vset.pattern.permute.xlu0 0
  %1148 = vperm.xlu0 %1147, %v958
  %v1149 = vpop.permute.xlu0 %1148
  %1152 = vset.pattern.permute.xlu0 0
  %1153 = vperm.xlu0 %1152, %v959
  %v1154 = vpop.permute.xlu0 %1153
  %1157 = vset.pattern.permute.xlu0 0
  %1158 = vperm.xlu0 %1157, %v960
  %v1159 = vpop.permute.xlu0 %1158
  %1162 = vset.pattern.permute.xlu0 0
  %1163 = vperm.xlu0 %1162, %v961
  %v1164 = vpop.permute.xlu0 %1163
  %1167 = vset.pattern.permute.xlu0 0
  %1168 = vperm.xlu0 %1167, %v962
  %v1169 = vpop.permute.xlu0 %1168
  %1172 = vset.pattern.permute.xlu0 0
  %1173 = vperm.xlu0 %1172, %v963
  %v1174 = vpop.permute.xlu0 %1173
  %1177 = vset.pattern.permute.xlu0 0
  %1178 = vperm.xlu0 %1177, %v964
  %v1179 = vpop.permute.xlu0 %1178
  %1182 = vset.pattern.permute.xlu0 0
  %1183 = vperm.xlu0 %1182, %v965
  %v1184 = vpop.permute.xlu0 %1183
  %1187 = vset.pattern.permute.xlu0 0
  %1188 = vperm.xlu0 %1187, %v966
  %v1189 = vpop.permute.xlu0 %1188
  %1192 = vset.pattern.permute.xlu0 0
  %1193 = vperm.xlu0 %1192, %v967
  %v1194 = vpop.permute.xlu0 %1193
  %1197 = vset.pattern.permute.xlu0 0
  %1198 = vperm.xlu0 %1197, %v968
  %v1199 = vpop.permute.xlu0 %1198
  %1202 = vset.pattern.permute.xlu0 0
  %1203 = vperm.xlu0 %1202, %v969
  %v1204 = vpop.permute.xlu0 %1203
  %1207 = vset.pattern.permute.xlu0 0
  %1208 = vperm.xlu0 %1207, %v970
  %v1209 = vpop.permute.xlu0 %1208
  %1212 = vset.pattern.permute.xlu0 0
  %1213 = vperm.xlu0 %1212, %v971
  %v1214 = vpop.permute.xlu0 %1213
  %1217 = vset.pattern.permute.xlu0 0
  %1218 = vperm.xlu0 %1217, %v972
  %v1219 = vpop.permute.xlu0 %1218
  %1222 = vset.pattern.permute.xlu0 0
  %1223 = vperm.xlu0 %1222, %v973
  %v1224 = vpop.permute.xlu0 %1223
  %1227 = vset.pattern.permute.xlu0 0
  %1228 = vperm.xlu0 %1227, %v974
  %v1229 = vpop.permute.xlu0 %1228
  %v1231 = vmul.f32 %v14, %v1074
  %v1232 = vmul.f32 %v15, %v1074
  %v1233 = vmul.f32 %v16, %v1079
  %v1234 = vmul.f32 %v17, %v1079
  %v1235 = vmul.f32 %v18, %v1084
  %v1236 = vmul.f32 %v19, %v1084
  %v1237 = vmul.f32 %v20, %v1089
  %v1238 = vmul.f32 %v21, %v1089
  %v1239 = vmul.f32 %v22, %v1094
  %v1240 = vmul.f32 %v23, %v1094
  %v1241 = vmul.f32 %v24, %v1099
  %v1242 = vmul.f32 %v25, %v1099
  %v1243 = vmul.f32 %v26, %v1104
  %v1244 = vmul.f32 %v27, %v1104
  %v1245 = vmul.f32 %v28, %v1109
  %v1246 = vmul.f32 %v29, %v1109
  %v1247 = vmul.f32 %v30, %v1114
  %v1248 = vmul.f32 %v31, %v1114
  %v1249 = vmul.f32 %v32, %v1119
  %v1250 = vmul.f32 %v33, %v1119
  %v1251 = vmul.f32 %v34, %v1124
  %v1252 = vmul.f32 %v35, %v1124
  %v1253 = vmul.f32 %v36, %v1129
  %v1254 = vmul.f32 %v37, %v1129
  %v1255 = vmul.f32 %v38, %v1134
  %v1256 = vmul.f32 %v39, %v1134
  %v1257 = vmul.f32 %v40, %v1139
  %v1258 = vmul.f32 %v41, %v1139
  %v1259 = vmul.f32 %v42, %v1144
  %v1260 = vmul.f32 %v43, %v1144
  %v1261 = vmul.f32 %v44, %v1149
  %v1262 = vmul.f32 %v45, %v1149
  %v1263 = vmul.f32 %v46, %v1154
  %v1264 = vmul.f32 %v47, %v1154
  %v1265 = vmul.f32 %v48, %v1159
  %v1266 = vmul.f32 %v49, %v1159
  %v1267 = vmul.f32 %v50, %v1164
  %v1268 = vmul.f32 %v51, %v1164
  %v1269 = vmul.f32 %v52, %v1169
  %v1270 = vmul.f32 %v53, %v1169
  %v1271 = vmul.f32 %v54, %v1174
  %v1272 = vmul.f32 %v55, %v1174
  %v1273 = vmul.f32 %v56, %v1179
  %v1274 = vmul.f32 %v57, %v1179
  %v1275 = vmul.f32 %v58, %v1184
  %v1276 = vmul.f32 %v59, %v1184
  %v1277 = vmul.f32 %v60, %v1189
  %v1278 = vmul.f32 %v61, %v1189
  %v1279 = vmul.f32 %v62, %v1194
  %v1280 = vmul.f32 %v63, %v1194
  %v1281 = vmul.f32 %v64, %v1199
  %v1282 = vmul.f32 %v65, %v1199
  %v1283 = vmul.f32 %v66, %v1204
  %v1284 = vmul.f32 %v67, %v1204
  %v1285 = vmul.f32 %v68, %v1209
  %v1286 = vmul.f32 %v69, %v1209
  %v1287 = vmul.f32 %v70, %v1214
  %v1288 = vmul.f32 %v71, %v1214
  %v1289 = vmul.f32 %v72, %v1219
  %v1290 = vmul.f32 %v73, %v1219
  %v1291 = vmul.f32 %v74, %v1224
  %v1292 = vmul.f32 %v75, %v1224
  %v1293 = vmul.f32 %v76, %v1229
  %v1294 = vmul.f32 %v77, %v1229
  %1296 = vset.pattern.permute.xlu0 0
  %1297 = vperm.xlu0 %1296, %v1039
  %v1298 = vpop.permute.xlu0 %1297
  %1301 = vset.pattern.permute.xlu0 0
  %1302 = vperm.xlu0 %1301, %v1040
  %v1303 = vpop.permute.xlu0 %1302
  %1306 = vset.pattern.permute.xlu0 0
  %1307 = vperm.xlu0 %1306, %v1041
  %v1308 = vpop.permute.xlu0 %1307
  %1311 = vset.pattern.permute.xlu0 0
  %1312 = vperm.xlu0 %1311, %v1042
  %v1313 = vpop.permute.xlu0 %1312
  %1316 = vset.pattern.permute.xlu0 0
  %1317 = vperm.xlu0 %1316, %v1043
  %v1318 = vpop.permute.xlu0 %1317
  %1321 = vset.pattern.permute.xlu0 0
  %1322 = vperm.xlu0 %1321, %v1044
  %v1323 = vpop.permute.xlu0 %1322
  %1326 = vset.pattern.permute.xlu0 0
  %1327 = vperm.xlu0 %1326, %v1045
  %v1328 = vpop.permute.xlu0 %1327
  %1331 = vset.pattern.permute.xlu0 0
  %1332 = vperm.xlu0 %1331, %v1046
  %v1333 = vpop.permute.xlu0 %1332
  %1336 = vset.pattern.permute.xlu0 0
  %1337 = vperm.xlu0 %1336, %v1047
  %v1338 = vpop.permute.xlu0 %1337
  %1341 = vset.pattern.permute.xlu0 0
  %1342 = vperm.xlu0 %1341, %v1048
  %v1343 = vpop.permute.xlu0 %1342
  %1346 = vset.pattern.permute.xlu0 0
  %1347 = vperm.xlu0 %1346, %v1049
  %v1348 = vpop.permute.xlu0 %1347
  %1351 = vset.pattern.permute.xlu0 0
  %1352 = vperm.xlu0 %1351, %v1050
  %v1353 = vpop.permute.xlu0 %1352
  %1356 = vset.pattern.permute.xlu0 0
  %1357 = vperm.xlu0 %1356, %v1051
  %v1358 = vpop.permute.xlu0 %1357
  %1361 = vset.pattern.permute.xlu0 0
  %1362 = vperm.xlu0 %1361, %v1052
  %v1363 = vpop.permute.xlu0 %1362
  %1366 = vset.pattern.permute.xlu0 0
  %1367 = vperm.xlu0 %1366, %v1053
  %v1368 = vpop.permute.xlu0 %1367
  %1371 = vset.pattern.permute.xlu0 0
  %1372 = vperm.xlu0 %1371, %v1054
  %v1373 = vpop.permute.xlu0 %1372
  %1376 = vset.pattern.permute.xlu0 0
  %1377 = vperm.xlu0 %1376, %v1055
  %v1378 = vpop.permute.xlu0 %1377
  %1381 = vset.pattern.permute.xlu0 0
  %1382 = vperm.xlu0 %1381, %v1056
  %v1383 = vpop.permute.xlu0 %1382
  %1386 = vset.pattern.permute.xlu0 0
  %1387 = vperm.xlu0 %1386, %v1057
  %v1388 = vpop.permute.xlu0 %1387
  %1391 = vset.pattern.permute.xlu0 0
  %1392 = vperm.xlu0 %1391, %v1058
  %v1393 = vpop.permute.xlu0 %1392
  %1396 = vset.pattern.permute.xlu0 0
  %1397 = vperm.xlu0 %1396, %v1059
  %v1398 = vpop.permute.xlu0 %1397
  %1401 = vset.pattern.permute.xlu0 0
  %1402 = vperm.xlu0 %1401, %v1060
  %v1403 = vpop.permute.xlu0 %1402
  %1406 = vset.pattern.permute.xlu0 0
  %1407 = vperm.xlu0 %1406, %v1061
  %v1408 = vpop.permute.xlu0 %1407
  %1411 = vset.pattern.permute.xlu0 0
  %1412 = vperm.xlu0 %1411, %v1062
  %v1413 = vpop.permute.xlu0 %1412
  %1416 = vset.pattern.permute.xlu0 0
  %1417 = vperm.xlu0 %1416, %v1063
  %v1418 = vpop.permute.xlu0 %1417
  %1421 = vset.pattern.permute.xlu0 0
  %1422 = vperm.xlu0 %1421, %v1064
  %v1423 = vpop.permute.xlu0 %1422
  %1426 = vset.pattern.permute.xlu0 0
  %1427 = vperm.xlu0 %1426, %v1065
  %v1428 = vpop.permute.xlu0 %1427
  %1431 = vset.pattern.permute.xlu0 0
  %1432 = vperm.xlu0 %1431, %v1066
  %v1433 = vpop.permute.xlu0 %1432
  %1436 = vset.pattern.permute.xlu0 0
  %1437 = vperm.xlu0 %1436, %v1067
  %v1438 = vpop.permute.xlu0 %1437
  %1441 = vset.pattern.permute.xlu0 0
  %1442 = vperm.xlu0 %1441, %v1068
  %v1443 = vpop.permute.xlu0 %1442
  %1446 = vset.pattern.permute.xlu0 0
  %1447 = vperm.xlu0 %1446, %v1069
  %v1448 = vpop.permute.xlu0 %1447
  %1451 = vset.pattern.permute.xlu0 0
  %1452 = vperm.xlu0 %1451, %v1070
  %v1453 = vpop.permute.xlu0 %1452
  %v1455 = vadd.f32 %v1231, %v1298
  %v1456 = vadd.f32 %v1232, %v1298
  %v1457 = vadd.f32 %v1233, %v1303
  %v1458 = vadd.f32 %v1234, %v1303
  %v1459 = vadd.f32 %v1235, %v1308
  %v1460 = vadd.f32 %v1236, %v1308
  %v1461 = vadd.f32 %v1237, %v1313
  %v1462 = vadd.f32 %v1238, %v1313
  %v1463 = vadd.f32 %v1239, %v1318
  %v1464 = vadd.f32 %v1240, %v1318
  %v1465 = vadd.f32 %v1241, %v1323
  %v1466 = vadd.f32 %v1242, %v1323
  %v1467 = vadd.f32 %v1243, %v1328
  %v1468 = vadd.f32 %v1244, %v1328
  %v1469 = vadd.f32 %v1245, %v1333
  %v1470 = vadd.f32 %v1246, %v1333
  %v1471 = vadd.f32 %v1247, %v1338
  %v1472 = vadd.f32 %v1248, %v1338
  %v1473 = vadd.f32 %v1249, %v1343
  %v1474 = vadd.f32 %v1250, %v1343
  %v1475 = vadd.f32 %v1251, %v1348
  %v1476 = vadd.f32 %v1252, %v1348
  %v1477 = vadd.f32 %v1253, %v1353
  %v1478 = vadd.f32 %v1254, %v1353
  %v1479 = vadd.f32 %v1255, %v1358
  %v1480 = vadd.f32 %v1256, %v1358
  %v1481 = vadd.f32 %v1257, %v1363
  %v1482 = vadd.f32 %v1258, %v1363
  %v1483 = vadd.f32 %v1259, %v1368
  %v1484 = vadd.f32 %v1260, %v1368
  %v1485 = vadd.f32 %v1261, %v1373
  %v1486 = vadd.f32 %v1262, %v1373
  %v1487 = vadd.f32 %v1263, %v1378
  %v1488 = vadd.f32 %v1264, %v1378
  %v1489 = vadd.f32 %v1265, %v1383
  %v1490 = vadd.f32 %v1266, %v1383
  %v1491 = vadd.f32 %v1267, %v1388
  %v1492 = vadd.f32 %v1268, %v1388
  %v1493 = vadd.f32 %v1269, %v1393
  %v1494 = vadd.f32 %v1270, %v1393
  %v1495 = vadd.f32 %v1271, %v1398
  %v1496 = vadd.f32 %v1272, %v1398
  %v1497 = vadd.f32 %v1273, %v1403
  %v1498 = vadd.f32 %v1274, %v1403
  %v1499 = vadd.f32 %v1275, %v1408
  %v1500 = vadd.f32 %v1276, %v1408
  %v1501 = vadd.f32 %v1277, %v1413
  %v1502 = vadd.f32 %v1278, %v1413
  %v1503 = vadd.f32 %v1279, %v1418
  %v1504 = vadd.f32 %v1280, %v1418
  %v1505 = vadd.f32 %v1281, %v1423
  %v1506 = vadd.f32 %v1282, %v1423
  %v1507 = vadd.f32 %v1283, %v1428
  %v1508 = vadd.f32 %v1284, %v1428
  %v1509 = vadd.f32 %v1285, %v1433
  %v1510 = vadd.f32 %v1286, %v1433
  %v1511 = vadd.f32 %v1287, %v1438
  %v1512 = vadd.f32 %v1288, %v1438
  %v1513 = vadd.f32 %v1289, %v1443
  %v1514 = vadd.f32 %v1290, %v1443
  %v1515 = vadd.f32 %v1291, %v1448
  %v1516 = vadd.f32 %v1292, %v1448
  %v1517 = vadd.f32 %v1293, %v1453
  %v1518 = vadd.f32 %v1294, %v1453
  %v1519 = vmax.f32 %v1455, 0.0
  %v1520 = vmax.f32 %v1456, 0.0
  %v1521 = vmax.f32 %v1457, 0.0
  %v1522 = vmax.f32 %v1458, 0.0
  %v1523 = vmax.f32 %v1459, 0.0
  %v1524 = vmax.f32 %v1460, 0.0
  %v1525 = vmax.f32 %v1461, 0.0
  %v1526 = vmax.f32 %v1462, 0.0
  %v1527 = vmax.f32 %v1463, 0.0
  %v1528 = vmax.f32 %v1464, 0.0
  %v1529 = vmax.f32 %v1465, 0.0
  %v1530 = vmax.f32 %v1466, 0.0
  %v1531 = vmax.f32 %v1467, 0.0
  %v1532 = vmax.f32 %v1468, 0.0
  %v1533 = vmax.f32 %v1469, 0.0
  %v1534 = vmax.f32 %v1470, 0.0
  %v1535 = vmax.f32 %v1471, 0.0
  %v1536 = vmax.f32 %v1472, 0.0
  %v1537 = vmax.f32 %v1473, 0.0
  %v1538 = vmax.f32 %v1474, 0.0
  %v1539 = vmax.f32 %v1475, 0.0
  %v1540 = vmax.f32 %v1476, 0.0
  %v1541 = vmax.f32 %v1477, 0.0
  %v1542 = vmax.f32 %v1478, 0.0
  %v1543 = vmax.f32 %v1479, 0.0
  %v1544 = vmax.f32 %v1480, 0.0
  %v1545 = vmax.f32 %v1481, 0.0
  %v1546 = vmax.f32 %v1482, 0.0
  %v1547 = vmax.f32 %v1483, 0.0
  %v1548 = vmax.f32 %v1484, 0.0
  %v1549 = vmax.f32 %v1485, 0.0
  %v1550 = vmax.f32 %v1486, 0.0
  %v1551 = vmax.f32 %v1487, 0.0
  %v1552 = vmax.f32 %v1488, 0.0
  %v1553 = vmax.f32 %v1489, 0.0
  %v1554 = vmax.f32 %v1490, 0.0
  %v1555 = vmax.f32 %v1491, 0.0
  %v1556 = vmax.f32 %v1492, 0.0
  %v1557 = vmax.f32 %v1493, 0.0
  %v1558 = vmax.f32 %v1494, 0.0
  %v1559 = vmax.f32 %v1495, 0.0
  %v1560 = vmax.f32 %v1496, 0.0
  %v1561 = vmax.f32 %v1497, 0.0
  %v1562 = vmax.f32 %v1498, 0.0
  %v1563 = vmax.f32 %v1499, 0.0
  %v1564 = vmax.f32 %v1500, 0.0
  %v1565 = vmax.f32 %v1501, 0.0
  %v1566 = vmax.f32 %v1502, 0.0
  %v1567 = vmax.f32 %v1503, 0.0
  %v1568 = vmax.f32 %v1504, 0.0
  %v1569 = vmax.f32 %v1505, 0.0
  %v1570 = vmax.f32 %v1506, 0.0
  %v1571 = vmax.f32 %v1507, 0.0
  %v1572 = vmax.f32 %v1508, 0.0
  %v1573 = vmax.f32 %v1509, 0.0
  %v1574 = vmax.f32 %v1510, 0.0
  %v1575 = vmax.f32 %v1511, 0.0
  %v1576 = vmax.f32 %v1512, 0.0
  %v1577 = vmax.f32 %v1513, 0.0
  %v1578 = vmax.f32 %v1514, 0.0
  %v1579 = vmax.f32 %v1515, 0.0
  %v1580 = vmax.f32 %v1516, 0.0
  %v1581 = vmax.f32 %v1517, 0.0
  %v1582 = vmax.f32 %v1518, 0.0
  %1583 = vst [vmem:[%s3] sm:$0xff] %v1519
  %1584 = vst.msk [vmem:[%s3 + $0x8] sm:$0xff] %vm78, %v1520
  %1585 = vst [vmem:[%s3 + $0x10] sm:$0xff] %v1521
  %1586 = vst.msk [vmem:[%s3 + $0x18] sm:$0xff] %vm78, %v1522
  %1587 = vst [vmem:[%s3 + $0x20] sm:$0xff] %v1523
  %1588 = vst.msk [vmem:[%s3 + $0x28] sm:$0xff] %vm78, %v1524
  %1589 = vst [vmem:[%s3 + $0x30] sm:$0xff] %v1525
  %1590 = vst.msk [vmem:[%s3 + $0x38] sm:$0xff] %vm78, %v1526
  %1591 = vst [vmem:[%s3 + $0x40] sm:$0xff] %v1527
  %1592 = vst.msk [vmem:[%s3 + $0x48] sm:$0xff] %vm78, %v1528
  %1593 = vst [vmem:[%s3 + $0x50] sm:$0xff] %v1529
  %1594 = vst.msk [vmem:[%s3 + $0x58] sm:$0xff] %vm78, %v1530
  %1595 = vst [vmem:[%s3 + $0x60] sm:$0xff] %v1531
  %1596 = vst.msk [vmem:[%s3 + $0x68] sm:$0xff] %vm78, %v1532
  %1597 = vst [vmem:[%s3 + $0x70] sm:$0xff] %v1533
  %1598 = vst.msk [vmem:[%s3 + $0x78] sm:$0xff] %vm78, %v1534
  %1599 = vst [vmem:[%s3 + $0x80] sm:$0xff] %v1535
  %1600 = vst.msk [vmem:[%s3 + $0x88] sm:$0xff] %vm78, %v1536
  %1601 = vst [vmem:[%s3 + $0x90] sm:$0xff] %v1537
  %1602 = vst.msk [vmem:[%s3 + $0x98] sm:$0xff] %vm78, %v1538
  %1603 = vst [vmem:[%s3 + $0xa0] sm:$0xff] %v1539
  %1604 = vst.msk [vmem:[%s3 + $0xa8] sm:$0xff] %vm78, %v1540
  %1605 = vst [vmem:[%s3 + $0xb0] sm:$0xff] %v1541
  %1606 = vst.msk [vmem:[%s3 + $0xb8] sm:$0xff] %vm78, %v1542
  %1607 = vst [vmem:[%s3 + $0xc0] sm:$0xff] %v1543
  %1608 = vst.msk [vmem:[%s3 + $0xc8] sm:$0xff] %vm78, %v1544
  %1609 = vst [vmem:[%s3 + $0xd0] sm:$0xff] %v1545
  %1610 = vst.msk [vmem:[%s3 + $0xd8] sm:$0xff] %vm78, %v1546
  %1611 = vst [vmem:[%s3 + $0xe0] sm:$0xff] %v1547
  %1612 = vst.msk [vmem:[%s3 + $0xe8] sm:$0xff] %vm78, %v1548
  %1613 = vst [vmem:[%s3 + $0xf0] sm:$0xff] %v1549
  %1614 = vst.msk [vmem:[%s3 + $0xf8] sm:$0xff] %vm78, %v1550
  %1615 = vst [vmem:[%s3 + $0x100] sm:$0xff] %v1551
  %1616 = vst.msk [vmem:[%s3 + $0x108] sm:$0xff] %vm78, %v1552
  %1617 = vst [vmem:[%s3 + $0x110] sm:$0xff] %v1553
  %1618 = vst.msk [vmem:[%s3 + $0x118] sm:$0xff] %vm78, %v1554
  %1619 = vst [vmem:[%s3 + $0x120] sm:$0xff] %v1555
  %1620 = vst.msk [vmem:[%s3 + $0x128] sm:$0xff] %vm78, %v1556
  %1621 = vst [vmem:[%s3 + $0x130] sm:$0xff] %v1557
  %1622 = vst.msk [vmem:[%s3 + $0x138] sm:$0xff] %vm78, %v1558
  %1623 = vst [vmem:[%s3 + $0x140] sm:$0xff] %v1559
  %1624 = vst.msk [vmem:[%s3 + $0x148] sm:$0xff] %vm78, %v1560
  %1625 = vst [vmem:[%s3 + $0x150] sm:$0xff] %v1561
  %1626 = vst.msk [vmem:[%s3 + $0x158] sm:$0xff] %vm78, %v1562
  %1627 = vst [vmem:[%s3 + $0x160] sm:$0xff] %v1563
  %1628 = vst.msk [vmem:[%s3 + $0x168] sm:$0xff] %vm78, %v1564
  %1629 = vst [vmem:[%s3 + $0x170] sm:$0xff] %v1565
  %1630 = vst.msk [vmem:[%s3 + $0x178] sm:$0xff] %vm78, %v1566
  %1631 = vst [vmem:[%s3 + $0x180] sm:$0xff] %v1567
  %1632 = vst.msk [vmem:[%s3 + $0x188] sm:$0xff] %vm78, %v1568
  %1633 = vst [vmem:[%s3 + $0x190] sm:$0xff] %v1569
  %1634 = vst.msk [vmem:[%s3 + $0x198] sm:$0xff] %vm78, %v1570
  %1635 = vst [vmem:[%s3 + $0x1a0] sm:$0xff] %v1571
  %1636 = vst.msk [vmem:[%s3 + $0x1a8] sm:$0xff] %vm78, %v1572
  %1637 = vst [vmem:[%s3 + $0x1b0] sm:$0xff] %v1573
  %1638 = vst.msk [vmem:[%s3 + $0x1b8] sm:$0xff] %vm78, %v1574
  %1639 = vst [vmem:[%s3 + $0x1c0] sm:$0xff] %v1575
  %1640 = vst.msk [vmem:[%s3 + $0x1c8] sm:$0xff] %vm78, %v1576
  %1641 = vst [vmem:[%s3 + $0x1d0] sm:$0xff] %v1577
  %1642 = vst.msk [vmem:[%s3 + $0x1d8] sm:$0xff] %vm78, %v1578
  %1643 = vst [vmem:[%s3 + $0x1e0] sm:$0xff] %v1579
  %1644 = vst.msk [vmem:[%s3 + $0x1e8] sm:$0xff] %vm78, %v1580
  %1645 = vst [vmem:[%s3 + $0x1f0] sm:$0xff] %v1581
  %1646 = vst.msk [vmem:[%s3 + $0x1f8] sm:$0xff] %vm78, %v1582
  // Predicated region
  $region14: #{tpu_custom_call.1} parent=0 // pred_check
    _
  $region15: #{tpu_custom_call.1} parent=0 // pred_check_branch
    %1648 = sbr.rel (0) target = $region17
  $region16: #{tpu_custom_call.1} parent=0 // pred_region
    _
  $region17: #{tpu_custom_call.1} parent=0 // pred_fallthru
    _
  // Predicated region
  $region18: #{tpu_custom_call.1} parent=0 // pred_check
    _
  $region19: #{tpu_custom_call.1} parent=0 // pred_check_branch
    %1650 = sbr.rel (0) target = $region21
  $region20: #{tpu_custom_call.1} parent=0 // pred_region
    _
  $region21: #{tpu_custom_call.1} parent=0 // pred_fallthru
    _

</llo_original>
